<compile_context>
chip_gen: v7x
topology: tpu7x:2x2x1
jax: 0.10.0
libtpu: 0.0.40
codegen_flags: <defaults>
</compile_context>

<pallas_src>
import math

import numpy as np
import jax
import jax.numpy as jnp
from jax.experimental import pallas as pl
from jax.experimental.pallas import tpu as pltpu


def _make_tables(num_embeddings: int, n_neighbors: int):
    """Block-diagonal frequency matrix (K, K*E) and phase row (1, K*E)."""
    half = num_embeddings // 2
    freq = np.exp(
        np.arange(0, num_embeddings, 2, dtype=np.float32)
        * -(math.log(10000.0) / num_embeddings)
    )                                                               # (half,)
    # Channel layout matches cat(cos, sin, dim=-1): first half cos, second sin.
    freq_ch = np.concatenate([freq, freq]).astype(np.float32)       # (E,)
    phase_ch = np.concatenate(
        [np.full((half,), np.pi / 2, dtype=np.float32),
         np.zeros((half,), dtype=np.float32)]
    ).astype(np.float32)                                            # (E,)

    ke = n_neighbors * num_embeddings
    sel = np.zeros((n_neighbors, ke), dtype=np.float32)
    for k in range(n_neighbors):
        sel[k, k * num_embeddings:(k + 1) * num_embeddings] = freq_ch
    phase_flat = np.tile(phase_ch, n_neighbors).reshape(1, ke)      # (1, K*E)
    return jnp.asarray(sel), jnp.asarray(phase_flat)


def _make_kernel(tile_n: int):
    def kernel(e_idx_ref, sel_ref, phase_ref, out_ref):
        # e_idx_ref : (1, TN, K)    int32
        # sel_ref   : (K, K*E)      f32   block-diagonal frequency matrix
        # phase_ref : (1, K*E)      f32   pi/2 for cos-half, 0 for sin-half
        # out_ref   : (1, TN, K*E)  out_dtype, lane-dense flattened output
        e = e_idx_ref[0]                                   # (TN, K) int32
        node0 = pl.program_id(1) * tile_n                  # global row offset
        ii = jax.lax.broadcasted_iota(jnp.int32, e.shape, 0) + node0
        d = (e - ii).astype(jnp.float32)                   # (TN, K), exact

        # One tiny MXU dot expands d across its E output channels and folds in
        # the frequency multiply; no padded broadcast temporaries, no relayout.
        angle = jnp.dot(
            d, sel_ref[...],
            precision=jax.lax.Precision.HIGHEST,
            preferred_element_type=jnp.float32,
        )                                                  # (TN, K*E)

        # Fused cos/sin via phase offset; single full-width store.
        out_ref[0] = jnp.sin(angle + phase_ref[...]).astype(out_ref.dtype)

    return kernel


def _choose_tile_n(n_nodes: int, row_bytes: int) -> int:
    # ~2 MiB of output per grid step: big enough to amortize the ~0.35 us
    # per-step overhead (~85%+ of HBM roofline), small enough that the
    # double-buffered in/out blocks plus temporaries fit comfortably in the
    # 32 MiB scoped-VMEM limit set below (and v5e's 16 MiB default).
    target = 2 * 1024 * 1024
    tn = max(8, (target // max(row_bytes, 1)) // 8 * 8)    # multiple of 8
    if tn >= n_nodes:
        return n_nodes
    # Prefer a nearby multiple of 8 that divides n_nodes (no wasted partial
    # last tile); fall back to tn otherwise.
    for cand in range(tn, max(tn // 2, 8) - 1, -8):
        if n_nodes % cand == 0:
            return cand
    return tn


def positional_encodings(e_idx: jax.Array, num_embeddings: int,
                         out_dtype=jnp.float32) -> jax.Array:
    """Pallas TPU implementation of PositionalEncodings.forward.

    Args:
      e_idx: int32 array [B, N_nodes, N_neighbors] of neighbor indices.
      num_embeddings: size of the positional-encoding channel dim (even).
      out_dtype: output dtype (f32 matches the PyTorch module; bf16 available
        for write-bound consumers).

    Returns:
      out_dtype array [B, N_nodes, N_neighbors, num_embeddings].
    """
    assert num_embeddings % 2 == 0
    b, n_nodes, n_neighbors = e_idx.shape
    ke = n_neighbors * num_embeddings
    # NOTE: the store is fully lane-dense (unmasked vst) when ke % 128 == 0
    # (true for the default K=8, E=16).  Other shapes remain correct but use
    # masked partial stores.
    row_bytes = ke * jnp.dtype(out_dtype).itemsize
    tn = _choose_tile_n(n_nodes, row_bytes)
    grid = (b, pl.cdiv(n_nodes, tn))

    sel, phase = _make_tables(num_embeddings, n_neighbors)
    kernel = _make_kernel(tn)

    cost = pl.CostEstimate(
        flops=2 * b * n_nodes * n_neighbors * ke,          # the tiny MXU dot
        transcendentals=b * n_nodes * ke,                  # one sin per elem
        bytes_accessed=e_idx.size * 4 + b * n_nodes * row_bytes,
    )

    out_flat = pl.pallas_call(
        kernel,
        out_shape=jax.ShapeDtypeStruct((b, n_nodes, ke), out_dtype),
        grid_spec=pltpu.PrefetchScalarGridSpec(
            num_scalar_prefetch=0,
            grid=grid,
            in_specs=[
                pl.BlockSpec((1, tn, n_neighbors), lambda bi, ti: (bi, ti, 0)),
                pl.BlockSpec((n_neighbors, ke), lambda bi, ti: (0, 0)),
                pl.BlockSpec((1, ke), lambda bi, ti: (0, 0)),
            ],
            out_specs=pl.BlockSpec((1, tn, ke), lambda bi, ti: (bi, ti, 0)),
        ),
        compiler_params=pltpu.CompilerParams(
            dimension_semantics=("parallel", "parallel"),
            vmem_limit_bytes=32 * 1024 * 1024,
        ),
        cost_estimate=cost,
    )(e_idx, sel, phase)

    # Free contiguous-view reshape back to the module's channels-last layout.
    return out_flat.reshape(b, n_nodes, n_neighbors, num_embeddings)


def _reference(e_idx: jax.Array, num_embeddings: int) -> jax.Array:
    # Pure-JAX transcription of the PyTorch forward, for verification.
    n_nodes = e_idx.shape[1]
    ii = jnp.arange(n_nodes, dtype=jnp.float32).reshape(1, -1, 1)
    d = (e_idx.astype(jnp.float32) - ii)[..., None]
    freq = jnp.exp(
        jnp.arange(0, num_embeddings, 2, dtype=jnp.float32)
        * -(math.log(10000.0) / num_embeddings)
    )
    angles = d * freq.reshape(1, 1, 1, -1)
    return jnp.concatenate([jnp.cos(angles), jnp.sin(angles)], axis=-1)


if __name__ == "__main__":
    key = jax.random.PRNGKey(0)
    B, N_NODES, N_NEIGHBORS = 2, 16, 8
    NUM_EMBEDDINGS = 16

    # Neighbor indices: integers in [0, N_NODES)
    e_idx = jax.random.randint(key, (B, N_NODES, N_NEIGHBORS), 0, N_NODES,
                               dtype=jnp.int32)

    out = positional_encodings(e_idx, NUM_EMBEDDINGS)
    out = jax.block_until_ready(out)

    ref = _reference(e_idx, NUM_EMBEDDINGS)
    assert out.shape == (B, N_NODES, N_NEIGHBORS, NUM_EMBEDDINGS)
    assert out.dtype == jnp.float32
    assert jnp.allclose(out, ref, atol=1e-4, rtol=1e-4)

    print("KERNEL_OK")
</pallas_src>

<mosaic_0001>
module attributes {stable_mosaic.version = 11 : i64} {
  func.func @kernel(%arg0: i32, %arg1: i32, %arg2: memref<1x16x8xi32, #tpu.memory_space<vmem>>, %arg3: memref<8x128xf32, #tpu.memory_space<vmem>>, %arg4: memref<1x128xf32, #tpu.memory_space<vmem>>, %arg5: memref<1x16x128xf32, #tpu.memory_space<vmem>>) attributes {dimension_semantics = [#tpu.dimension_semantics<parallel>, #tpu.dimension_semantics<parallel>], iteration_bounds = array<i64: 2, 1>, scalar_prefetch = 0 : i64, scratch_operands = 0 : i64, tpu.core_type = #tpu.core_type<tc>, window_params = [{transform_indices = @transform_0, window_bounds = array<i64: 1, 16, 8>}, {pipeline_mode = #tpu.pipeline_mode<synchronous>, transform_indices = @transform_1, window_bounds = array<i64: 8, 128>}, {pipeline_mode = #tpu.pipeline_mode<synchronous>, transform_indices = @transform_2, window_bounds = array<i64: 1, 128>}, {transform_indices = @transform_3, window_bounds = array<i64: 1, 16, 128>}]} {
    %c0 = arith.constant 0 : index
    %c0_0 = arith.constant 0 : index
    %c0_1 = arith.constant 0 : index
    %0 = vector.load %arg2[%c0, %c0_0, %c0_1] : memref<1x16x8xi32, #tpu.memory_space<vmem>>, vector<1x16x8xi32>
    %1 = vector.shape_cast %0 : vector<1x16x8xi32> to vector<16x8xi32>
    %c16_i32 = arith.constant 16 : i32
    %2 = arith.muli %arg1, %c16_i32 : i32
    %3 = tpu.iota {dimensions = array<i32: 0>} : vector<16x8xi32>
    %4 = vector.broadcast %2 : i32 to vector<16x8xi32>
    %5 = arith.addi %3, %4 : vector<16x8xi32>
    %6 = arith.subi %1, %5 : vector<16x8xi32>
    %7 = arith.sitofp %6 : vector<16x8xi32> to vector<16x8xf32>
    %c0_2 = arith.constant 0 : index
    %c0_3 = arith.constant 0 : index
    %8 = vector.load %arg3[%c0_2, %c0_3] : memref<8x128xf32, #tpu.memory_space<vmem>>, vector<8x128xf32>
    %cst = arith.constant dense<0.000000e+00> : vector<16x128xf32>
    %9 = tpu.matmul %7, %8, %cst {dimension_numbers = #tpu.dot_dimension_numbers<[1], [0], [0], [1], [0, 0, 1, 1], [], []>, precision = #tpu.contract_precision<fp32>} : vector<16x8xf32>, vector<8x128xf32>, vector<16x128xf32> -> vector<16x128xf32>
    %c0_4 = arith.constant 0 : index
    %c0_5 = arith.constant 0 : index
    %10 = vector.load %arg4[%c0_4, %c0_5] : memref<1x128xf32, #tpu.memory_space<vmem>>, vector<1x128xf32>
    %11 = vector.broadcast %10 : vector<1x128xf32> to vector<16x128xf32>
    %12 = arith.addf %9, %11 : vector<16x128xf32>
    %13 = math.sin %12 : vector<16x128xf32>
    %c0_6 = arith.constant 0 : index
    %c0_7 = arith.constant 0 : index
    %c0_8 = arith.constant 0 : index
    %14 = vector.load %arg5[%c0_6, %c0_7, %c0_8] : memref<1x16x128xf32, #tpu.memory_space<vmem>>, vector<1x16x128xf32>
    %15 = vector.shape_cast %14 : vector<1x16x128xf32> to vector<16x128xf32>
    %16 = vector.shape_cast %13 : vector<16x128xf32> to vector<1x16x128xf32>
    tpu.vector_store %arg5[%c0_6, %c0_7, %c0_8], %16 {strides = array<i32>} : memref<1x16x128xf32, #tpu.memory_space<vmem>>, vector<1x16x128xf32>,
    return
  }
  func.func @transform_0(%arg0: i32, %arg1: i32) -> (i32, i32, i32) {
    %c0_i32 = arith.constant 0 : i32
    %c0_i32_0 = arith.constant 0 : i32
    return %arg0, %arg1, %c0_i32 : i32, i32, i32
  }
  func.func @transform_1(%arg0: i32, %arg1: i32) -> (i32, i32) {
    %c0_i32 = arith.constant 0 : i32
    %c0_i32_0 = arith.constant 0 : i32
    %c0_i32_1 = arith.constant 0 : i32
    return %c0_i32, %c0_i32_0 : i32, i32
  }
  func.func @transform_2(%arg0: i32, %arg1: i32) -> (i32, i32) {
    %c0_i32 = arith.constant 0 : i32
    %c0_i32_0 = arith.constant 0 : i32
    %c0_i32_1 = arith.constant 0 : i32
    return %c0_i32, %c0_i32_0 : i32, i32
  }
  func.func @transform_3(%arg0: i32, %arg1: i32) -> (i32, i32, i32) {
    %c0_i32 = arith.constant 0 : i32
    %c0_i32_0 = arith.constant 0 : i32
    return %arg0, %arg1, %c0_i32 : i32, i32, i32
  }
}

</mosaic_0001>

<llo_original>
// kernel: tpu_custom_call.1
$region0: #{tpu_custom_call.1}
  #allocation0 [shape = 'u32[]', space=smem, size = 0x4, offset = 0x4, fixed_abs, tag = 'smem constant byte address 0x4 - core index']
  #allocation1 [shape = 'u32[144,128]{1,0:T(1,128)}', space=vmem, size = 0x12000, scoped, tag = 'internal scratch']
  %s0 = inlined_call_operand.vmem [shape: s32[2,16,8], index: 0, kind: input, shape index: {}]
  %s1 = inlined_call_operand.vmem [shape: f32[8,128], index: 1, kind: input, shape index: {}]
  %s2 = inlined_call_operand.vmem [shape: f32[1,128], index: 2, kind: input, shape index: {}]
  %s3 = inlined_call_operand.hbm [shape: f32[2,16,128], index: 3, kind: output, shape index: {}]
  %s4 = sld [smem:[#allocation0]]
  $region45: #{tpu_custom_call.1} parent=0
    _
  %s6 = ssub.s32 1, %s4
  %s7 = scalar_select 0, %s6, %s4
  $region1: #{tpu_custom_call.1} parent=0
    #allocation2 [shape = 'u8[16384]{0}', space=vmem, size = 0x4000, scoped, tag = 'output window, operand 0']
    #allocation3 [shape = 's32[2]{0}', space=sflag, size = 0x8, scoped, tag = 'scoped memory for tpu_custom_call.1']
    %8 = vsyncpa [#allocation3], 0
    %s9 = scalar_lea.sflag [#allocation3], 1
    %10 = vsyncpa %s9, 0
    loop: start=0, step=1, limit=4
    $region2: #{tpu_custom_call.1} parent=1 // loop_pre_header
      _
    $region3: #{tpu_custom_call.1} parent=1 // loop_header
      %s12 = sphi 0, %s16
      %p13 = scmp.ge.s32.totalorder %s12, 4
      %s19 = sphi 0, %s31
      %s20 = sphi 0, %s27
      %s21 = sphi 0, %s19
      %s22 = sphi 0, %s20
      %s23 = sphi 0, %s21
      %s24 = sphi 0, %s22
      %s36 = sphi 0, %s38
      %s39 = sphi 0, %s36
      %s40 = sphi 0, %s39
      %s56 = sphi 0, %s40
      %s60 = sphi 0, %s60
      %s62 = sphi 0, %s60
      %s63 = sphi 0, %s62
      %s77 = sphi 0, %s63
      %s81 = sphi 0, %s81
      %s83 = sphi 0, %s81
      %s84 = sphi 0, %s83
      %s98 = sphi 0, %s84
      %s106 = sphi 0, %s108
      %s109 = sphi 0, %s106
      %s110 = sphi 0, %s109
      %s126 = sphi 0, %s110
    $region4: #{tpu_custom_call.1} parent=1 // loop_header_branch
      %15 = sbr.rel (%p13) target = $region8
    $region5: #{tpu_custom_call.1} parent=1 // loop_body
      %s17 = ssub.s32 %s12, 1
      %s18 = ssub.s32 %s12, 2
      %s25 = sadd.s32 1, %s20
      %p26 = scmp.ge.s32.totalorder %s25, 1
      %s27 = scalar_select %p26, 0, %s25
      %s28 = sadd.s32 1, %s19
      %s29 = scalar_select %p26, %s28, %s19
      %p30 = scmp.ge.s32.totalorder %s29, 2
      %s31 = scalar_select %p30, 0, %s29
      %s32 = ssub.s32 %s19, %s31
      %s33 = ssub.s32 %s20, %s27
      %s34 = sor.u32 %s32, %s33
      %p35 = scmp.eq.s32.totalorder %s34, 0
      %s37 = sadd.s32 %s36, 1
      %s38 = scalar_select %p35, %s36, %s37
      %p41 = pneg %p35
      %p42 = scmp.eq.s32.totalorder %s12, 1
      %p43 = por %p41, %p42
      %p44 = scmp.ne.s32.totalorder %s36, %s39
      %p45 = scmp.eq.s32.totalorder %s12, 0
      %p46 = por %p44, %p45
      %p47 = scmp.ne.s32.totalorder %s36, %s39
      %p48 = scmp.eq.s32.totalorder %s17, 1
      %p49 = por %p47, %p48
      %p50 = scmp.ne.s32.totalorder %s39, %s40
      %p51 = scmp.eq.s32.totalorder %s17, 0
      %p52 = por %p50, %p51
      %p53 = scmp.ne.s32.totalorder %s39, %s40
      %p54 = scmp.eq.s32.totalorder %s18, 1
      %p55 = por %p53, %p54
      %p57 = scmp.ne.s32.totalorder %s40, %s56
      %p58 = scmp.eq.s32.totalorder %s18, 0
      %p59 = por %p57, %p58
      %s61 = sadd.s32 %s60, 1
      %p64 = scmp.eq.s32.totalorder %s12, 1
      %p65 = scmp.ne.s32.totalorder %s60, %s62
      %p66 = scmp.eq.s32.totalorder %s12, 0
      %p67 = por %p65, %p66
      %p68 = scmp.ne.s32.totalorder %s60, %s62
      %p69 = scmp.eq.s32.totalorder %s17, 1
      %p70 = por %p68, %p69
      %p71 = scmp.ne.s32.totalorder %s62, %s63
      %p72 = scmp.eq.s32.totalorder %s17, 0
      %p73 = por %p71, %p72
      %p74 = scmp.ne.s32.totalorder %s62, %s63
      %p75 = scmp.eq.s32.totalorder %s18, 1
      %p76 = por %p74, %p75
      %p78 = scmp.ne.s32.totalorder %s63, %s77
      %p79 = scmp.eq.s32.totalorder %s18, 0
      %p80 = por %p78, %p79
      %s82 = sadd.s32 %s81, 1
      %p85 = scmp.eq.s32.totalorder %s12, 1
      %p86 = scmp.ne.s32.totalorder %s81, %s83
      %p87 = scmp.eq.s32.totalorder %s12, 0
      %p88 = por %p86, %p87
      %p89 = scmp.ne.s32.totalorder %s81, %s83
      %p90 = scmp.eq.s32.totalorder %s17, 1
      %p91 = por %p89, %p90
      %p92 = scmp.ne.s32.totalorder %s83, %s84
      %p93 = scmp.eq.s32.totalorder %s17, 0
      %p94 = por %p92, %p93
      %p95 = scmp.ne.s32.totalorder %s83, %s84
      %p96 = scmp.eq.s32.totalorder %s18, 1
      %p97 = por %p95, %p96
      %p99 = scmp.ne.s32.totalorder %s84, %s98
      %p100 = scmp.eq.s32.totalorder %s18, 0
      %p101 = por %p99, %p100
      %s102 = ssub.s32 %s19, %s31
      %s103 = ssub.s32 %s20, %s27
      %s104 = sor.u32 %s102, %s103
      %p105 = scmp.eq.s32.totalorder %s104, 0
      %s107 = sadd.s32 %s106, 1
      %s108 = scalar_select %p105, %s106, %s107
      %p111 = pneg %p105
      %p112 = scmp.eq.s32.totalorder %s12, 1
      %p113 = por %p111, %p112
      %p114 = scmp.ne.s32.totalorder %s106, %s109
      %p115 = scmp.eq.s32.totalorder %s12, 0
      %p116 = por %p114, %p115
      %p117 = scmp.ne.s32.totalorder %s106, %s109
      %p118 = scmp.eq.s32.totalorder %s17, 1
      %p119 = por %p117, %p118
      %p120 = scmp.ne.s32.totalorder %s109, %s110
      %p121 = scmp.eq.s32.totalorder %s17, 0
      %p122 = por %p120, %p121
      %p123 = scmp.ne.s32.totalorder %s109, %s110
      %p124 = scmp.eq.s32.totalorder %s18, 1
      %p125 = por %p123, %p124
      %p127 = scmp.ne.s32.totalorder %s110, %s126
      %p128 = scmp.eq.s32.totalorder %s18, 0
      %p129 = por %p127, %p128
      %p130 = scmp.le.s32.totalorder 1, %s12
      %p131 = scmp.lt.s32.totalorder %s12, 3
      %p132 = pnand %p130, %p131
      %p133 = pneg %p132
      // Predicated region
      $region9: #{tpu_custom_call.1} parent=5 // pred_check
        _
      $region10: #{tpu_custom_call.1} parent=5 // pred_check_branch
        %135 = sbr.rel (%p132) target = $region12
      $region11: #{tpu_custom_call.1} parent=5 // pred_region
        %s136 = ssub.s32 %s12, 1
        // Predicated region
        $region13: #{tpu_custom_call.1} parent=11 // pred_check
          %p137 = pneg %p73
        $region14: #{tpu_custom_call.1} parent=11 // pred_check_branch
          %139 = sbr.rel (%p137) target = $region16
        $region15: #{tpu_custom_call.1} parent=11 // pred_region
          _
        $region16: #{tpu_custom_call.1} parent=11 // pred_fallthru
          _
        // Predicated region
        $region17: #{tpu_custom_call.1} parent=11 // pred_check
          %p140 = pneg %p94
        $region18: #{tpu_custom_call.1} parent=11 // pred_check_branch
          %142 = sbr.rel (%p140) target = $region20
        $region19: #{tpu_custom_call.1} parent=11 // pred_region
          _
        $region20: #{tpu_custom_call.1} parent=11 // pred_fallthru
          _
      $region12: #{tpu_custom_call.1} parent=5 // pred_fallthru
        _
      %p143 = scmp.lt.s32.totalorder %s12, 2
      // Predicated region
      $region21: #{tpu_custom_call.1} parent=5 // pred_check
        %p144 = pneg %p143
      $region22: #{tpu_custom_call.1} parent=5 // pred_check_branch
        %146 = sbr.rel (%p144) target = $region24
      $region23: #{tpu_custom_call.1} parent=5 // pred_region
        // Predicated region
        $region25: #{tpu_custom_call.1} parent=23 // pred_check
          %p147 = pneg %p46
        $region26: #{tpu_custom_call.1} parent=23 // pred_check_branch
          %149 = sbr.rel (%p147) target = $region28
        $region27: #{tpu_custom_call.1} parent=23 // pred_region
          %s150 = smul.u32 2, %s20
          %p151 = scmp.lt.s32.totalorder %s19, 1
          %s152 = scalar_select %p151, %s19, 1
          %p153 = scmp.lt.s32.totalorder %s150, 1
          %s154 = scalar_select %p153, %s150, 1
          %s155 = smul.addr %s152, 2
          %s156 = sadd.s32 %s154, %s155
          %s157 = smul.addr %s156, 8
          %s158 = scalar_lea.vmem %s0, %s157
          %s159 = smul.u32 2, %s20
        $region28: #{tpu_custom_call.1} parent=23 // pred_fallthru
          _
      $region24: #{tpu_custom_call.1} parent=5 // pred_fallthru
        _
      %p160 = scmp.le.s32.totalorder 1, %s12
      %p161 = scmp.lt.s32.totalorder %s12, 3
      %p162 = pnand %p160, %p161
      %p163 = pneg %p162
      // Predicated region
      $region29: #{tpu_custom_call.1} parent=5 // pred_check
        _
      $region30: #{tpu_custom_call.1} parent=5 // pred_check_branch
        %165 = sbr.rel (%p162) target = $region32
      $region31: #{tpu_custom_call.1} parent=5 // pred_region
        %s166 = ssub.s32 %s12, 1
        %s167 = smul.u32 2, %s22
        %p168 = scmp.lt.s32.totalorder %s21, 1
        %s169 = scalar_select %p168, %s21, 1
        %p170 = scmp.lt.s32.totalorder %s167, 1
        %s171 = scalar_select %p170, %s167, 1
        %s172 = smul.addr %s169, 2
        %s173 = sadd.s32 %s171, %s172
        %s174 = smul.addr %s173, 8
        %s175 = scalar_lea.vmem %s0, %s174
        %p176 = pneg %p52
        %p177 = pneg %p49
        %p178 = pneg %p73
        %p179 = pneg %p70
        %p180 = pneg %p94
        %p181 = pneg %p91
        %p182 = pneg %p122
        %p183 = pneg %p119
        %s184 = sand.u32 %s109, 1
        %s185 = scalar_lea.sflag [#allocation3], %s184
        %s186 = sand.u32 %s109, 1
        %s187 = smul.addr %s186, 16
        %s188 = scalar_lea.vmem [#allocation2], %s187
        %s189 = smul.u32 2, %s22
        %p190 = scmp.lt.s32.totalorder %s21, 1
        %s191 = scalar_select %p190, %s21, 1
        %p192 = scmp.lt.s32.totalorder %s189, 1
        %s193 = scalar_select %p192, %s189, 1
        %s194 = smul.addr %s191, 2
        %s195 = sadd.s32 %s193, %s194
        %s196 = smul.addr %s195, 8
        %s197 = scalar_lea.vmem %s0, %s196
        %s198 = smul.u32 2, %s22
        %s199 = smul.u32 2, %s22
        %v200 = vld [vmem:[%s197] sm:$0xff]
        %v201 = vld [vmem:[%s197 + $0x8] sm:$0xff]
        %s202 = smul.u32 %s22, 16
        %v203 = vlaneseq
        %v204 = vshrl.u32 %v203, 7
        %v205 = vadd.s32 %v204, 8
        %v206 = vstv %s202
        %v207 = vadd.s32 %v204, %v206
        %v208 = vadd.s32 %v205, %v206
        %v209 = vsub.s32 %v200, %v207
        %v210 = vsub.s32 %v201, %v208
        %v211 = vcvt.s32.f32 %v209
        %v212 = vcvt.s32.f32 %v210
        %v213 = vld [vmem:[%s1] sm:$0xff]
        %v214 = vld [vmem:[%s2] sm:$0x1]
        %v216 = vlaneseq
        %v217 = vshrl.u32 %v216, 7
        %v218 = vsub.s32 0, %v217
        %v219 = vrot.slane %v214, %v218
        %vm221 = vcmask 64512
        %v223 = vsel %vm221, %v211, 0
        %v226 = vsel %vm221, %v212, 0
        %228 = vmatprep.subr.mxu0 0.0
        %v229 = vand.u32 %v213, 4294901760
        %230 = vmatpush1.msra.mxu0 %v229
        %231 = vmatprep.subr.mxu0 0.0
        %232 = vmatpush1.msra.mxu0 0.0
        %233 = vmatprep.subr.mxu0 0.0
        %234 = vmatpush1.msra.mxu0 0.0
        %235 = vmatprep.subr.mxu0 0.0
        %236 = vmatpush1.msra.mxu0 0.0
        %237 = vmatprep.subr.mxu0 0.0
        %238 = vmatpush1.msra.mxu0 0.0
        %239 = vmatprep.subr.mxu0 0.0
        %240 = vmatpush1.msra.mxu0 0.0
        %241 = vmatprep.subr.mxu0 0.0
        %242 = vmatpush1.msra.mxu0 0.0
        %243 = vmatprep.subr.mxu0 0.0
        %244 = vmatpush1.msra.mxu0 0.0
        %245 = vmatprep.subr.mxu0 0.0
        %246 = vmatpush1.msra.mxu0 0.0
        %247 = vmatprep.subr.mxu0 0.0
        %248 = vmatpush1.msra.mxu0 0.0
        %249 = vmatprep.subr.mxu0 0.0
        %250 = vmatpush1.msra.mxu0 0.0
        %251 = vmatprep.subr.mxu0 0.0
        %252 = vmatpush1.msra.mxu0 0.0
        %253 = vmatprep.subr.mxu0 0.0
        %254 = vmatpush1.msra.mxu0 0.0
        %255 = vmatprep.subr.mxu0 0.0
        %256 = vmatpush1.msra.mxu0 0.0
        %257 = vmatprep.subr.mxu0 0.0
        %258 = vmatpush1.msra.mxu0 0.0
        %259 = vmatprep.subr.mxu0 0.0
        %260 = vmatpush1.msra.mxu0 0.0
        %261 = vmatprep.subr.mxu0 0.0
        %262 = vmatpush1.msra.mxu0 0.0
        %263 = vmatprep.subr.mxu0 0.0
        %264 = vmatpush1.msra.mxu0 0.0
        %265 = vmatprep.subr.mxu0 0.0
        %266 = vmatpush1.msra.mxu0 0.0
        %267 = vmatprep.subr.mxu0 0.0
        %268 = vmatpush1.msra.mxu0 0.0
        %269 = vmatprep.subr.mxu0 0.0
        %270 = vmatpush1.msra.mxu0 0.0
        %271 = vmatprep.subr.mxu0 0.0
        %272 = vmatpush1.msra.mxu0 0.0
        %273 = vmatprep.subr.mxu0 0.0
        %274 = vmatpush1.msra.mxu0 0.0
        %275 = vmatprep.subr.mxu0 0.0
        %276 = vmatpush1.msra.mxu0 0.0
        %277 = vmatprep.subr.mxu0 0.0
        %278 = vmatpush1.msra.mxu0 0.0
        %279 = vmatprep.subr.mxu0 0.0
        %280 = vmatpush1.msra.mxu0 0.0
        %281 = vmatprep.subr.mxu0 0.0
        %282 = vmatpush1.msra.mxu0 0.0
        %283 = vmatprep.subr.mxu0 0.0
        %284 = vmatpush1.msra.mxu0 0.0
        %285 = vmatprep.subr.mxu0 0.0
        %286 = vmatpush1.msra.mxu0 0.0
        %287 = vmatprep.subr.mxu0 0.0
        %288 = vmatpush1.msra.mxu0 0.0
        %289 = vmatprep.subr.mxu0 0.0
        %290 = vmatpush1.msra.mxu0 0.0
        %291 = vmatprep.subr.mxu0 0.0
        %292 = vmatpush1.msra.mxu0 0.0
        %293 = vmatprep.mubr.f32.mxu0 0.0
        %v294 = vand.u32 %v223, 4294901760
        %v295 = vsub.f32 %v223, %v294
        %v296 = vand.u32 %v295, 4294901760
        %v297 = vsub.f32 %v295, %v296
        %v298 = vand.u32 %v297, 4294901760
        %299 = vmatmul.mubr.f32.gmra.mrb[0].mxu0 %v298
        %v300 = vpop.f32.mrb[0].mxu0
        %v301 = vadd.f32 %v219, %v300
        %v302 = vpop.f32.mrb[0].mxu0
        %303 = vmatprep.mubr.f32.mxu0 0.0
        %v304 = vand.u32 %v226, 4294901760
        %v305 = vsub.f32 %v226, %v304
        %v306 = vand.u32 %v305, 4294901760
        %v307 = vsub.f32 %v305, %v306
        %v308 = vand.u32 %v307, 4294901760
        %309 = vmatmul.mubr.f32.gmra.mrb[0].mxu0 %v308
        %v310 = vpop.f32.mrb[0].mxu0
        %v311 = vadd.f32 %v219, %v310
        %v312 = vpop.f32.mrb[0].mxu0
        %313 = vdwg.mxu0
        %314 = vmatprep.subr.mxu0 0.0
        %v315 = vand.u32 %v213, 4294901760
        %v316 = vsub.f32 %v213, %v315
        %v317 = vand.u32 %v316, 4294901760
        %v318 = vsub.f32 %v316, %v317
        %v319 = vand.u32 %v318, 4294901760
        %320 = vmatpush1.msra.mxu0 %v319
        %321 = vmatprep.subr.mxu0 0.0
        %322 = vmatpush1.msra.mxu0 0.0
        %323 = vmatprep.subr.mxu0 0.0
        %324 = vmatpush1.msra.mxu0 0.0
        %325 = vmatprep.subr.mxu0 0.0
        %326 = vmatpush1.msra.mxu0 0.0
        %327 = vmatprep.subr.mxu0 0.0
        %328 = vmatpush1.msra.mxu0 0.0
        %329 = vmatprep.subr.mxu0 0.0
        %330 = vmatpush1.msra.mxu0 0.0
        %331 = vmatprep.subr.mxu0 0.0
        %332 = vmatpush1.msra.mxu0 0.0
        %333 = vmatprep.subr.mxu0 0.0
        %334 = vmatpush1.msra.mxu0 0.0
        %335 = vmatprep.subr.mxu0 0.0
        %336 = vmatpush1.msra.mxu0 0.0
        %337 = vmatprep.subr.mxu0 0.0
        %338 = vmatpush1.msra.mxu0 0.0
        %339 = vmatprep.subr.mxu0 0.0
        %340 = vmatpush1.msra.mxu0 0.0
        %341 = vmatprep.subr.mxu0 0.0
        %342 = vmatpush1.msra.mxu0 0.0
        %343 = vmatprep.subr.mxu0 0.0
        %344 = vmatpush1.msra.mxu0 0.0
        %345 = vmatprep.subr.mxu0 0.0
        %346 = vmatpush1.msra.mxu0 0.0
        %347 = vmatprep.subr.mxu0 0.0
        %348 = vmatpush1.msra.mxu0 0.0
        %349 = vmatprep.subr.mxu0 0.0
        %350 = vmatpush1.msra.mxu0 0.0
        %351 = vmatprep.subr.mxu0 0.0
        %352 = vmatpush1.msra.mxu0 0.0
        %353 = vmatprep.subr.mxu0 0.0
        %354 = vmatpush1.msra.mxu0 0.0
        %355 = vmatprep.subr.mxu0 0.0
        %356 = vmatpush1.msra.mxu0 0.0
        %357 = vmatprep.subr.mxu0 0.0
        %358 = vmatpush1.msra.mxu0 0.0
        %359 = vmatprep.subr.mxu0 0.0
        %360 = vmatpush1.msra.mxu0 0.0
        %361 = vmatprep.subr.mxu0 0.0
        %362 = vmatpush1.msra.mxu0 0.0
        %363 = vmatprep.subr.mxu0 0.0
        %364 = vmatpush1.msra.mxu0 0.0
        %365 = vmatprep.subr.mxu0 0.0
        %366 = vmatpush1.msra.mxu0 0.0
        %367 = vmatprep.subr.mxu0 0.0
        %368 = vmatpush1.msra.mxu0 0.0
        %369 = vmatprep.subr.mxu0 0.0
        %370 = vmatpush1.msra.mxu0 0.0
        %371 = vmatprep.subr.mxu0 0.0
        %372 = vmatpush1.msra.mxu0 0.0
        %373 = vmatprep.subr.mxu0 0.0
        %374 = vmatpush1.msra.mxu0 0.0
        %375 = vmatprep.subr.mxu0 0.0
        %376 = vmatpush1.msra.mxu0 0.0
        %377 = vmatprep.subr.mxu0 0.0
        %378 = vmatpush1.msra.mxu0 0.0
        %379 = vmatprep.subr.mxu0 0.0
        %380 = vmatpush1.msra.mxu0 0.0
        %381 = vmatprep.subr.mxu0 0.0
        %382 = vmatpush1.msra.mxu0 0.0
        %383 = vmatprep.mubr.f32.mxu0 0.0
        %v384 = vand.u32 %v223, 4294901760
        %385 = vmatmul.mubr.f32.gmra.mrb[0].mxu0 %v384
        %v386 = vpop.f32.mrb[0].mxu0
        %v387 = vadd.f32 %v301, %v386
        %v388 = vpop.f32.mrb[0].mxu0
        %389 = vmatprep.mubr.f32.mxu0 0.0
        %v390 = vand.u32 %v226, 4294901760
        %391 = vmatmul.mubr.f32.gmra.mrb[0].mxu0 %v390
        %v392 = vpop.f32.mrb[0].mxu0
        %v393 = vadd.f32 %v311, %v392
        %v394 = vpop.f32.mrb[0].mxu0
        %395 = vdwg.mxu0
        %396 = vmatprep.subr.mxu0 0.0
        %v397 = vand.u32 %v213, 4294901760
        %v398 = vsub.f32 %v213, %v397
        %399 = vmatpush1.msra.mxu0 %v398
        %400 = vmatprep.subr.mxu0 0.0
        %401 = vmatpush1.msra.mxu0 0.0
        %402 = vmatprep.subr.mxu0 0.0
        %403 = vmatpush1.msra.mxu0 0.0
        %404 = vmatprep.subr.mxu0 0.0
        %405 = vmatpush1.msra.mxu0 0.0
        %406 = vmatprep.subr.mxu0 0.0
        %407 = vmatpush1.msra.mxu0 0.0
        %408 = vmatprep.subr.mxu0 0.0
        %409 = vmatpush1.msra.mxu0 0.0
        %410 = vmatprep.subr.mxu0 0.0
        %411 = vmatpush1.msra.mxu0 0.0
        %412 = vmatprep.subr.mxu0 0.0
        %413 = vmatpush1.msra.mxu0 0.0
        %414 = vmatprep.subr.mxu0 0.0
        %415 = vmatpush1.msra.mxu0 0.0
        %416 = vmatprep.subr.mxu0 0.0
        %417 = vmatpush1.msra.mxu0 0.0
        %418 = vmatprep.subr.mxu0 0.0
        %419 = vmatpush1.msra.mxu0 0.0
        %420 = vmatprep.subr.mxu0 0.0
        %421 = vmatpush1.msra.mxu0 0.0
        %422 = vmatprep.subr.mxu0 0.0
        %423 = vmatpush1.msra.mxu0 0.0
        %424 = vmatprep.subr.mxu0 0.0
        %425 = vmatpush1.msra.mxu0 0.0
        %426 = vmatprep.subr.mxu0 0.0
        %427 = vmatpush1.msra.mxu0 0.0
        %428 = vmatprep.subr.mxu0 0.0
        %429 = vmatpush1.msra.mxu0 0.0
        %430 = vmatprep.subr.mxu0 0.0
        %431 = vmatpush1.msra.mxu0 0.0
        %432 = vmatprep.subr.mxu0 0.0
        %433 = vmatpush1.msra.mxu0 0.0
        %434 = vmatprep.subr.mxu0 0.0
        %435 = vmatpush1.msra.mxu0 0.0
        %436 = vmatprep.subr.mxu0 0.0
        %437 = vmatpush1.msra.mxu0 0.0
        %438 = vmatprep.subr.mxu0 0.0
        %439 = vmatpush1.msra.mxu0 0.0
        %440 = vmatprep.subr.mxu0 0.0
        %441 = vmatpush1.msra.mxu0 0.0
        %442 = vmatprep.subr.mxu0 0.0
        %443 = vmatpush1.msra.mxu0 0.0
        %444 = vmatprep.subr.mxu0 0.0
        %445 = vmatpush1.msra.mxu0 0.0
        %446 = vmatprep.subr.mxu0 0.0
        %447 = vmatpush1.msra.mxu0 0.0
        %448 = vmatprep.subr.mxu0 0.0
        %449 = vmatpush1.msra.mxu0 0.0
        %450 = vmatprep.subr.mxu0 0.0
        %451 = vmatpush1.msra.mxu0 0.0
        %452 = vmatprep.subr.mxu0 0.0
        %453 = vmatpush1.msra.mxu0 0.0
        %454 = vmatprep.subr.mxu0 0.0
        %455 = vmatpush1.msra.mxu0 0.0
        %456 = vmatprep.subr.mxu0 0.0
        %457 = vmatpush1.msra.mxu0 0.0
        %458 = vmatprep.subr.mxu0 0.0
        %459 = vmatpush1.msra.mxu0 0.0
        %460 = vmatprep.subr.mxu0 0.0
        %461 = vmatpush1.msra.mxu0 0.0
        %462 = vmatprep.mubr.f32.mxu0 0.0
        %v463 = vand.u32 %v223, 4294901760
        %v464 = vsub.f32 %v223, %v463
        %465 = vmatmul.mubr.f32.gmra.mrb[0].mxu0 %v464
        %v466 = vpop.f32.mrb[0].mxu0
        %v467 = vadd.f32 %v387, %v466
        %v468 = vpop.f32.mrb[0].mxu0
        %469 = vmatprep.mubr.f32.mxu0 0.0
        %v470 = vand.u32 %v226, 4294901760
        %v471 = vsub.f32 %v226, %v470
        %472 = vmatmul.mubr.f32.gmra.mrb[0].mxu0 %v471
        %v473 = vpop.f32.mrb[0].mxu0
        %v474 = vadd.f32 %v393, %v473
        %v475 = vpop.f32.mrb[0].mxu0
        %476 = vdwg.mxu0
        %477 = vmatprep.subr.mxu0 0.0
        %v478 = vand.u32 %v213, 4294901760
        %479 = vmatpush1.msra.mxu0 %v478
        %480 = vmatprep.subr.mxu0 0.0
        %481 = vmatpush1.msra.mxu0 0.0
        %482 = vmatprep.subr.mxu0 0.0
        %483 = vmatpush1.msra.mxu0 0.0
        %484 = vmatprep.subr.mxu0 0.0
        %485 = vmatpush1.msra.mxu0 0.0
        %486 = vmatprep.subr.mxu0 0.0
        %487 = vmatpush1.msra.mxu0 0.0
        %488 = vmatprep.subr.mxu0 0.0
        %489 = vmatpush1.msra.mxu0 0.0
        %490 = vmatprep.subr.mxu0 0.0
        %491 = vmatpush1.msra.mxu0 0.0
        %492 = vmatprep.subr.mxu0 0.0
        %493 = vmatpush1.msra.mxu0 0.0
        %494 = vmatprep.subr.mxu0 0.0
        %495 = vmatpush1.msra.mxu0 0.0
        %496 = vmatprep.subr.mxu0 0.0
        %497 = vmatpush1.msra.mxu0 0.0
        %498 = vmatprep.subr.mxu0 0.0
        %499 = vmatpush1.msra.mxu0 0.0
        %500 = vmatprep.subr.mxu0 0.0
        %501 = vmatpush1.msra.mxu0 0.0
        %502 = vmatprep.subr.mxu0 0.0
        %503 = vmatpush1.msra.mxu0 0.0
        %504 = vmatprep.subr.mxu0 0.0
        %505 = vmatpush1.msra.mxu0 0.0
        %506 = vmatprep.subr.mxu0 0.0
        %507 = vmatpush1.msra.mxu0 0.0
        %508 = vmatprep.subr.mxu0 0.0
        %509 = vmatpush1.msra.mxu0 0.0
        %510 = vmatprep.subr.mxu0 0.0
        %511 = vmatpush1.msra.mxu0 0.0
        %512 = vmatprep.subr.mxu0 0.0
        %513 = vmatpush1.msra.mxu0 0.0
        %514 = vmatprep.subr.mxu0 0.0
        %515 = vmatpush1.msra.mxu0 0.0
        %516 = vmatprep.subr.mxu0 0.0
        %517 = vmatpush1.msra.mxu0 0.0
        %518 = vmatprep.subr.mxu0 0.0
        %519 = vmatpush1.msra.mxu0 0.0
        %520 = vmatprep.subr.mxu0 0.0
        %521 = vmatpush1.msra.mxu0 0.0
        %522 = vmatprep.subr.mxu0 0.0
        %523 = vmatpush1.msra.mxu0 0.0
        %524 = vmatprep.subr.mxu0 0.0
        %525 = vmatpush1.msra.mxu0 0.0
        %526 = vmatprep.subr.mxu0 0.0
        %527 = vmatpush1.msra.mxu0 0.0
        %528 = vmatprep.subr.mxu0 0.0
        %529 = vmatpush1.msra.mxu0 0.0
        %530 = vmatprep.subr.mxu0 0.0
        %531 = vmatpush1.msra.mxu0 0.0
        %532 = vmatprep.subr.mxu0 0.0
        %533 = vmatpush1.msra.mxu0 0.0
        %534 = vmatprep.subr.mxu0 0.0
        %535 = vmatpush1.msra.mxu0 0.0
        %536 = vmatprep.subr.mxu0 0.0
        %537 = vmatpush1.msra.mxu0 0.0
        %538 = vmatprep.subr.mxu0 0.0
        %539 = vmatpush1.msra.mxu0 0.0
        %540 = vmatprep.subr.mxu0 0.0
        %541 = vmatpush1.msra.mxu0 0.0
        %542 = vmatprep.mubr.f32.mxu0 0.0
        %v543 = vand.u32 %v223, 4294901760
        %v544 = vsub.f32 %v223, %v543
        %v545 = vand.u32 %v544, 4294901760
        %546 = vmatmul.mubr.f32.gmra.mrb[0].mxu0 %v545
        %v547 = vpop.f32.mrb[0].mxu0
        %v548 = vadd.f32 %v467, %v547
        %v549 = vpop.f32.mrb[0].mxu0
        %550 = vmatprep.mubr.f32.mxu0 0.0
        %v551 = vand.u32 %v226, 4294901760
        %v552 = vsub.f32 %v226, %v551
        %v553 = vand.u32 %v552, 4294901760
        %554 = vmatmul.mubr.f32.gmra.mrb[0].mxu0 %v553
        %v555 = vpop.f32.mrb[0].mxu0
        %v556 = vadd.f32 %v474, %v555
        %v557 = vpop.f32.mrb[0].mxu0
        %558 = vdwg.mxu0
        %559 = vmatprep.subr.mxu0 0.0
        %v560 = vand.u32 %v213, 4294901760
        %v561 = vsub.f32 %v213, %v560
        %v562 = vand.u32 %v561, 4294901760
        %563 = vmatpush1.msra.mxu0 %v562
        %564 = vmatprep.subr.mxu0 0.0
        %565 = vmatpush1.msra.mxu0 0.0
        %566 = vmatprep.subr.mxu0 0.0
        %567 = vmatpush1.msra.mxu0 0.0
        %568 = vmatprep.subr.mxu0 0.0
        %569 = vmatpush1.msra.mxu0 0.0
        %570 = vmatprep.subr.mxu0 0.0
        %571 = vmatpush1.msra.mxu0 0.0
        %572 = vmatprep.subr.mxu0 0.0
        %573 = vmatpush1.msra.mxu0 0.0
        %574 = vmatprep.subr.mxu0 0.0
        %575 = vmatpush1.msra.mxu0 0.0
        %576 = vmatprep.subr.mxu0 0.0
        %577 = vmatpush1.msra.mxu0 0.0
        %578 = vmatprep.subr.mxu0 0.0
        %579 = vmatpush1.msra.mxu0 0.0
        %580 = vmatprep.subr.mxu0 0.0
        %581 = vmatpush1.msra.mxu0 0.0
        %582 = vmatprep.subr.mxu0 0.0
        %583 = vmatpush1.msra.mxu0 0.0
        %584 = vmatprep.subr.mxu0 0.0
        %585 = vmatpush1.msra.mxu0 0.0
        %586 = vmatprep.subr.mxu0 0.0
        %587 = vmatpush1.msra.mxu0 0.0
        %588 = vmatprep.subr.mxu0 0.0
        %589 = vmatpush1.msra.mxu0 0.0
        %590 = vmatprep.subr.mxu0 0.0
        %591 = vmatpush1.msra.mxu0 0.0
        %592 = vmatprep.subr.mxu0 0.0
        %593 = vmatpush1.msra.mxu0 0.0
        %594 = vmatprep.subr.mxu0 0.0
        %595 = vmatpush1.msra.mxu0 0.0
        %596 = vmatprep.subr.mxu0 0.0
        %597 = vmatpush1.msra.mxu0 0.0
        %598 = vmatprep.subr.mxu0 0.0
        %599 = vmatpush1.msra.mxu0 0.0
        %600 = vmatprep.subr.mxu0 0.0
        %601 = vmatpush1.msra.mxu0 0.0
        %602 = vmatprep.subr.mxu0 0.0
        %603 = vmatpush1.msra.mxu0 0.0
        %604 = vmatprep.subr.mxu0 0.0
        %605 = vmatpush1.msra.mxu0 0.0
        %606 = vmatprep.subr.mxu0 0.0
        %607 = vmatpush1.msra.mxu0 0.0
        %608 = vmatprep.subr.mxu0 0.0
        %609 = vmatpush1.msra.mxu0 0.0
        %610 = vmatprep.subr.mxu0 0.0
        %611 = vmatpush1.msra.mxu0 0.0
        %612 = vmatprep.subr.mxu0 0.0
        %613 = vmatpush1.msra.mxu0 0.0
        %614 = vmatprep.subr.mxu0 0.0
        %615 = vmatpush1.msra.mxu0 0.0
        %616 = vmatprep.subr.mxu0 0.0
        %617 = vmatpush1.msra.mxu0 0.0
        %618 = vmatprep.subr.mxu0 0.0
        %619 = vmatpush1.msra.mxu0 0.0
        %620 = vmatprep.subr.mxu0 0.0
        %621 = vmatpush1.msra.mxu0 0.0
        %622 = vmatprep.subr.mxu0 0.0
        %623 = vmatpush1.msra.mxu0 0.0
        %624 = vmatprep.subr.mxu0 0.0
        %625 = vmatpush1.msra.mxu0 0.0
        %626 = vmatprep.mubr.f32.mxu0 0.0
        %v627 = vand.u32 %v223, 4294901760
        %628 = vmatmul.mubr.f32.gmra.mrb[0].mxu0 %v627
        %v629 = vpop.f32.mrb[0].mxu0
        %v630 = vadd.f32 %v548, %v629
        %v631 = vpop.f32.mrb[0].mxu0
        %632 = vmatprep.mubr.f32.mxu0 0.0
        %v633 = vand.u32 %v226, 4294901760
        %634 = vmatmul.mubr.f32.gmra.mrb[0].mxu0 %v633
        %v635 = vpop.f32.mrb[0].mxu0
        %v636 = vadd.f32 %v556, %v635
        %v637 = vpop.f32.mrb[0].mxu0
        %638 = vdwg.mxu0
        %639 = vmatprep.subr.mxu0 0.0
        %v640 = vand.u32 %v213, 4294901760
        %641 = vmatpush1.msra.mxu0 %v640
        %642 = vmatprep.subr.mxu0 0.0
        %643 = vmatpush1.msra.mxu0 0.0
        %644 = vmatprep.subr.mxu0 0.0
        %645 = vmatpush1.msra.mxu0 0.0
        %646 = vmatprep.subr.mxu0 0.0
        %647 = vmatpush1.msra.mxu0 0.0
        %648 = vmatprep.subr.mxu0 0.0
        %649 = vmatpush1.msra.mxu0 0.0
        %650 = vmatprep.subr.mxu0 0.0
        %651 = vmatpush1.msra.mxu0 0.0
        %652 = vmatprep.subr.mxu0 0.0
        %653 = vmatpush1.msra.mxu0 0.0
        %654 = vmatprep.subr.mxu0 0.0
        %655 = vmatpush1.msra.mxu0 0.0
        %656 = vmatprep.subr.mxu0 0.0
        %657 = vmatpush1.msra.mxu0 0.0
        %658 = vmatprep.subr.mxu0 0.0
        %659 = vmatpush1.msra.mxu0 0.0
        %660 = vmatprep.subr.mxu0 0.0
        %661 = vmatpush1.msra.mxu0 0.0
        %662 = vmatprep.subr.mxu0 0.0
        %663 = vmatpush1.msra.mxu0 0.0
        %664 = vmatprep.subr.mxu0 0.0
        %665 = vmatpush1.msra.mxu0 0.0
        %666 = vmatprep.subr.mxu0 0.0
        %667 = vmatpush1.msra.mxu0 0.0
        %668 = vmatprep.subr.mxu0 0.0
        %669 = vmatpush1.msra.mxu0 0.0
        %670 = vmatprep.subr.mxu0 0.0
        %671 = vmatpush1.msra.mxu0 0.0
        %672 = vmatprep.subr.mxu0 0.0
        %673 = vmatpush1.msra.mxu0 0.0
        %674 = vmatprep.subr.mxu0 0.0
        %675 = vmatpush1.msra.mxu0 0.0
        %676 = vmatprep.subr.mxu0 0.0
        %677 = vmatpush1.msra.mxu0 0.0
        %678 = vmatprep.subr.mxu0 0.0
        %679 = vmatpush1.msra.mxu0 0.0
        %680 = vmatprep.subr.mxu0 0.0
        %681 = vmatpush1.msra.mxu0 0.0
        %682 = vmatprep.subr.mxu0 0.0
        %683 = vmatpush1.msra.mxu0 0.0
        %684 = vmatprep.subr.mxu0 0.0
        %685 = vmatpush1.msra.mxu0 0.0
        %686 = vmatprep.subr.mxu0 0.0
        %687 = vmatpush1.msra.mxu0 0.0
        %688 = vmatprep.subr.mxu0 0.0
        %689 = vmatpush1.msra.mxu0 0.0
        %690 = vmatprep.subr.mxu0 0.0
        %691 = vmatpush1.msra.mxu0 0.0
        %692 = vmatprep.subr.mxu0 0.0
        %693 = vmatpush1.msra.mxu0 0.0
        %694 = vmatprep.subr.mxu0 0.0
        %695 = vmatpush1.msra.mxu0 0.0
        %696 = vmatprep.subr.mxu0 0.0
        %697 = vmatpush1.msra.mxu0 0.0
        %698 = vmatprep.subr.mxu0 0.0
        %699 = vmatpush1.msra.mxu0 0.0
        %700 = vmatprep.subr.mxu0 0.0
        %701 = vmatpush1.msra.mxu0 0.0
        %702 = vmatprep.subr.mxu0 0.0
        %703 = vmatpush1.msra.mxu0 0.0
        %704 = vmatprep.mubr.f32.mxu0 0.0
        %v705 = vand.u32 %v223, 4294901760
        %706 = vmatmul.mubr.f32.gmra.mrb[0].mxu0 %v705
        %v707 = vpop.f32.mrb[0].mxu0
        %v708 = vadd.f32 %v630, %v707
        %v709 = vpop.f32.mrb[0].mxu0
        %710 = vmatprep.mubr.f32.mxu0 0.0
        %v711 = vand.u32 %v226, 4294901760
        %712 = vmatmul.mubr.f32.gmra.mrb[0].mxu0 %v711
        %v713 = vpop.f32.mrb[0].mxu0
        %v714 = vadd.f32 %v636, %v713
        %v715 = vpop.f32.mrb[0].mxu0
        %716 = vdwg.mxu0
        %v717 = vand.u32 2147483647, %v708
        %vm718 = vcmp.le.f32.partialorder %v717, 0.7853982
        %vm719 = vcmp.lt.s32.totalorder %v708, 0
        %v720 = vand.u32 %v708, 2139095040
        %v721 = vshrl.u32 %v720, 23
        %v722 = vsub.s32 %v721, 127
        %v723 = vand.u32 2147483647, %v708
        %v724 = vand.u32 %v723, 8388607
        %v725 = vor.u32 %v724, 8388608
        %v726 = vsub.s32 0, %v725
        %v727 = vadd.s32 %v722, 1
        %vm728 = vcmp.gt.s32.totalorder %v727, 0
        %v729 = vsel %vm728, %v727, 0
        %v730 = vshrl.u32 %v729, 5
        %v731 = vand.u32 %v729, 31
        %v732 = vsub.s32 32, %v731
        %v733 = vshrl.u32 683565275, %v732
        %v734 = vshll.u32 683565275, %v731
        %v735 = vshrl.u32 2475754826, %v732
        %v736 = vor.u32 %v734, %v735
        %v737 = vshll.u32 2475754826, %v731
        %v738 = vshrl.u32 2131351028, %v732
        %v739 = vor.u32 %v737, %v738
        %v740 = vshll.u32 2131351028, %v731
        %v741 = vshrl.u32 2102212464, %v732
        %v742 = vor.u32 %v740, %v741
        %v743 = vshll.u32 2102212464, %v731
        %v744 = vshrl.u32 920167782, %v732
        %v745 = vor.u32 %v743, %v744
        %v746 = vshll.u32 920167782, %v731
        %v747 = vshrl.u32 1326507024, %v732
        %v748 = vor.u32 %v746, %v747
        %vm749 = vcmp.lt.s32.totalorder %v730, 1
        %vm750 = vcmp.lt.s32.totalorder %v730, 2
        %vm751 = vcmp.lt.s32.totalorder %v730, 3
        %vm752 = vcmp.lt.s32.totalorder %v730, 4
        %v753 = vsel %vm749, %v733, %v736
        %v754 = vsel %vm752, %v742, 2102212464
        %v755 = vsel %vm751, %v739, %v754
        %v756 = vsel %vm750, %v753, %v755
        %v757 = vsel %vm749, %v736, %v739
        %v758 = vsel %vm752, %v745, 920167782
        %v759 = vsel %vm751, %v742, %v758
        %v760 = vsel %vm750, %v757, %v759
        %v761 = vsel %vm749, %v739, %v742
        %v762 = vsel %vm752, %v748, 1326507024
        %v763 = vsel %vm751, %v745, %v762
        %v764 = vsel %vm750, %v761, %v763
        %v765 = vshll.u32 %v725, 8
        %v766 = vmul.u32.u64.compose %v765, %v764
        %v767 = vextract.low.u32 %v766
        %v768 = vextract.high.u32 %v766
        %v769 = vmul.u32.u64.compose %v765, %v760
        %v770 = vextract.low.u32 %v769
        %v771 = vextract.high.u32 %v769
        %v772 = vmul.u32 %v765, %v756
        %v773 = vadd.s32 %v768, %v770
        %vm774 = vc.u32 %v768, %v770
        %v775 = vadd.s32 %v771, 1
        %v776 = vsel %vm774, %v775, %v771
        %v777 = vadd.s32 %v772, %v776
        %v778 = vadd.s32 %v777, 536870912
        %v779 = vshrl.u32 %v778, 30
        %v780 = vshll.u32 %v779, 30
        %v781 = vsub.s32 %v777, %v780
        %vm782 = vcmp.lt.s32.totalorder %v781, 0
        %v783 = vsub.s32 0, %v781
        %v784 = vsel %vm782, %v783, %v781
        %v785 = vclz %v784
        %v786 = vsub.s32 %v785, 2
        %vm787 = vcmp.gt.s32.totalorder 0, %v786
        %v788 = vsel %vm787, 0, %v786
        %v789 = vsub.s32 32, %v788
        %v790 = vshll.u32 %v781, %v788
        %v791 = vshrl.u32 %v773, %v789
        %v792 = vor.u32 %v790, %v791
        %v793 = vsub.s32 4294967266, %v788
        %v794 = vadd.s32 %v793, 127
        %v795 = vshll.u32 %v794, 23
        %v796 = vor.u32 4788187, %v795
        %v797 = vand.u32 2147483647, %v796
        %v799 = vcvt.s32.f32 %v792
        %v800 = vmul.f32 %v799, %v797
        %v801 = vxor.u32 %v800, 2147483648
        %v802 = vsel %vm719, %v801, %v800
        %v803 = vsub.s32 4, %v779
        %v804 = vsel %vm719, %v803, %v779
        %v805 = vsel %vm718, %v708, %v802
        %v806 = vsel %vm718, 0, %v804
        %v807 = vcosq.f32.pop %v805
        %v808 = vsinq.f32.pop %v805
        %vm809 = vweird.f32 %v708
        %v810 = vadd.s32 %v806, 3
        %v811 = vand.u32 %v810, 3
        %vm812 = vcmp.lt.s32.totalorder %v811, 2
        %vm813 = vcmp.eq.s32.totalorder %v811, 0
        %v814 = vxor.u32 %v808, 2147483648
        %v815 = vsel %vm813, %v807, %v814
        %vm816 = vcmp.eq.s32.totalorder %v811, 2
        %v817 = vxor.u32 %v807, 2147483648
        %v818 = vsel %vm816, %v817, %v808
        %v819 = vsel %vm812, %v815, %v818
        %v820 = vsel %vm809, nan, %v819
        %v821 = vand.u32 2147483647, %v714
        %vm822 = vcmp.le.f32.partialorder %v821, 0.7853982
        %vm823 = vcmp.lt.s32.totalorder %v714, 0
        %v824 = vand.u32 %v714, 2139095040
        %v825 = vshrl.u32 %v824, 23
        %v826 = vsub.s32 %v825, 127
        %v827 = vand.u32 2147483647, %v714
        %v828 = vand.u32 %v827, 8388607
        %v829 = vor.u32 %v828, 8388608
        %v830 = vsub.s32 0, %v829
        %v831 = vadd.s32 %v826, 1
        %vm832 = vcmp.gt.s32.totalorder %v831, 0
        %v833 = vsel %vm832, %v831, 0
        %v834 = vshrl.u32 %v833, 5
        %v835 = vand.u32 %v833, 31
        %v836 = vsub.s32 32, %v835
        %v837 = vshrl.u32 683565275, %v836
        %v838 = vshll.u32 683565275, %v835
        %v839 = vshrl.u32 2475754826, %v836
        %v840 = vor.u32 %v838, %v839
        %v841 = vshll.u32 2475754826, %v835
        %v842 = vshrl.u32 2131351028, %v836
        %v843 = vor.u32 %v841, %v842
        %v844 = vshll.u32 2131351028, %v835
        %v845 = vshrl.u32 2102212464, %v836
        %v846 = vor.u32 %v844, %v845
        %v847 = vshll.u32 2102212464, %v835
        %v848 = vshrl.u32 920167782, %v836
        %v849 = vor.u32 %v847, %v848
        %v850 = vshll.u32 920167782, %v835
        %v851 = vshrl.u32 1326507024, %v836
        %v852 = vor.u32 %v850, %v851
        %vm853 = vcmp.lt.s32.totalorder %v834, 1
        %vm854 = vcmp.lt.s32.totalorder %v834, 2
        %vm855 = vcmp.lt.s32.totalorder %v834, 3
        %vm856 = vcmp.lt.s32.totalorder %v834, 4
        %v857 = vsel %vm853, %v837, %v840
        %v858 = vsel %vm856, %v846, 2102212464
        %v859 = vsel %vm855, %v843, %v858
        %v860 = vsel %vm854, %v857, %v859
        %v861 = vsel %vm853, %v840, %v843
        %v862 = vsel %vm856, %v849, 920167782
        %v863 = vsel %vm855, %v846, %v862
        %v864 = vsel %vm854, %v861, %v863
        %v865 = vsel %vm853, %v843, %v846
        %v866 = vsel %vm856, %v852, 1326507024
        %v867 = vsel %vm855, %v849, %v866
        %v868 = vsel %vm854, %v865, %v867
        %v869 = vshll.u32 %v829, 8
        %v870 = vmul.u32.u64.compose %v869, %v868
        %v871 = vextract.low.u32 %v870
        %v872 = vextract.high.u32 %v870
        %v873 = vmul.u32.u64.compose %v869, %v864
        %v874 = vextract.low.u32 %v873
        %v875 = vextract.high.u32 %v873
        %v876 = vmul.u32 %v869, %v860
        %v877 = vadd.s32 %v872, %v874
        %vm878 = vc.u32 %v872, %v874
        %v879 = vadd.s32 %v875, 1
        %v880 = vsel %vm878, %v879, %v875
        %v881 = vadd.s32 %v876, %v880
        %v882 = vadd.s32 %v881, 536870912
        %v883 = vshrl.u32 %v882, 30
        %v884 = vshll.u32 %v883, 30
        %v885 = vsub.s32 %v881, %v884
        %vm886 = vcmp.lt.s32.totalorder %v885, 0
        %v887 = vsub.s32 0, %v885
        %v888 = vsel %vm886, %v887, %v885
        %v889 = vclz %v888
        %v890 = vsub.s32 %v889, 2
        %vm891 = vcmp.gt.s32.totalorder 0, %v890
        %v892 = vsel %vm891, 0, %v890
        %v893 = vsub.s32 32, %v892
        %v894 = vshll.u32 %v885, %v892
        %v895 = vshrl.u32 %v877, %v893
        %v896 = vor.u32 %v894, %v895
        %v897 = vsub.s32 4294967266, %v892
        %v898 = vadd.s32 %v897, 127
        %v899 = vshll.u32 %v898, 23
        %v900 = vor.u32 4788187, %v899
        %v901 = vand.u32 2147483647, %v900
        %v903 = vcvt.s32.f32 %v896
        %v904 = vmul.f32 %v903, %v901
        %v905 = vxor.u32 %v904, 2147483648
        %v906 = vsel %vm823, %v905, %v904
        %v907 = vsub.s32 4, %v883
        %v908 = vsel %vm823, %v907, %v883
        %v909 = vsel %vm822, %v714, %v906
        %v910 = vsel %vm822, 0, %v908
        %v911 = vcosq.f32.pop %v909
        %v912 = vsinq.f32.pop %v909
        %vm913 = vweird.f32 %v714
        %v914 = vadd.s32 %v910, 3
        %v915 = vand.u32 %v914, 3
        %vm916 = vcmp.lt.s32.totalorder %v915, 2
        %vm917 = vcmp.eq.s32.totalorder %v915, 0
        %v918 = vxor.u32 %v912, 2147483648
        %v919 = vsel %vm917, %v911, %v918
        %vm920 = vcmp.eq.s32.totalorder %v915, 2
        %v921 = vxor.u32 %v911, 2147483648
        %v922 = vsel %vm920, %v921, %v912
        %v923 = vsel %vm916, %v919, %v922
        %v924 = vsel %vm913, nan, %v923
        %925 = vst [vmem:[%s188] sm:$0xff] %v820
        %926 = vst [vmem:[%s188 + $0x8] sm:$0xff] %v924
        %s927 = sand.u32 %s109, 1
        %s928 = scalar_lea.sflag [#allocation3], %s927
        %s929 = sand.u32 %s109, 1
        %s930 = smul.addr %s929, 16
        %s931 = scalar_lea.vmem [#allocation2], %s930
        // Predicated region
        $region33: #{tpu_custom_call.1} parent=31 // pred_check
          %p932 = pneg %p119
        $region34: #{tpu_custom_call.1} parent=31 // pred_check_branch
          %934 = sbr.rel (%p932) target = $region36
        $region35: #{tpu_custom_call.1} parent=31 // pred_region
          %s935 = smul.u32 2, %s22
          %s937 = ssub.s32 256, 256
          %938 = vsyncadd %s928, %s937
          %s939 = smul.addr %s21, 2
          %s940 = sadd.s32 %s935, %s939
          %s941 = smul.addr %s940, 128
          %s942 = scalar_lea.hbm %s3, %s941
          %s943 = sshll.u32 %s931, 4
          %s944 = int_to_ptr.vmem [resolvable:$true] %s943
          %949 = dma.vmem_to_hbm [thread:$0]  %s944, 256, %s942, %s928, 128, 128, 8
        $region36: #{tpu_custom_call.1} parent=31 // pred_fallthru
          _
      $region32: #{tpu_custom_call.1} parent=5 // pred_fallthru
        _
      %p950 = scmp.le.s32.totalorder 2, %s12
      // Predicated region
      $region37: #{tpu_custom_call.1} parent=5 // pred_check
        %p951 = pneg %p950
      $region38: #{tpu_custom_call.1} parent=5 // pred_check_branch
        %953 = sbr.rel (%p951) target = $region40
      $region39: #{tpu_custom_call.1} parent=5 // pred_region
        %s954 = ssub.s32 %s12, 2
        // Predicated region
        $region41: #{tpu_custom_call.1} parent=39 // pred_check
          %p955 = pneg %p125
        $region42: #{tpu_custom_call.1} parent=39 // pred_check_branch
          %957 = sbr.rel (%p955) target = $region44
        $region43: #{tpu_custom_call.1} parent=39 // pred_region
          %s958 = sand.u32 %s110, 1
          %s959 = scalar_lea.sflag [#allocation3], %s958
          %s960 = sand.u32 %s110, 1
          %s961 = smul.addr %s960, 16
          %s962 = scalar_lea.vmem [#allocation2], %s961
          %963 = dma.done %s959, 256
        $region44: #{tpu_custom_call.1} parent=39 // pred_fallthru
          _
      $region40: #{tpu_custom_call.1} parent=5 // pred_fallthru
        _
    $region6: #{tpu_custom_call.1} parent=1 // loop_footer
      %s16 = sadd.s32 1, %s12
    $region7: #{tpu_custom_call.1} parent=1 // loop_footer_branch
      %11 = sbr.rel target = $region3
    $region8: #{tpu_custom_call.1} parent=1 // loop_exit
      _
    %964 = vsyncpa [#allocation3], 1
    %s965 = scalar_lea.sflag [#allocation3], 1
    %966 = vsyncpa %s965, 1

</llo_original>
